<compile_context>
chip_gen: v7x
topology: tpu7x:2x2x1
jax: 0.10.0
libtpu: 0.0.40
codegen_flags: <defaults>
</compile_context>

<pallas_src>
from functools import partial

import jax
import jax.numpy as jnp
from jax import lax
from jax.experimental import pallas as pl
from jax.experimental.pallas import tpu as pltpu

EPS = 1e-5


# ---------------------------------------------------------------------------
# Generation-aware VMEM budget (v5e/v6e: 128 MiB physical, v7x: 64 MiB).
# ---------------------------------------------------------------------------
def _vmem_budget():
    phys = 64 << 20  # conservative fallback, safe on every generation
    try:
        info = pltpu.get_tpu_info()
        phys = int(getattr(info, "vmem_capacity_bytes", phys) or phys)
    except Exception:
        pass
    return min((phys * 3) // 4, 96 << 20)


# ---------------------------------------------------------------------------
# Fused fast path: x resident in VMEM, stats + apply in one kernel.
# ---------------------------------------------------------------------------
def _fused_kernel(x_ref, gain_ref, bias_ref, out_ref, mean_ref, var_ref, *,
                  inv_count, eps):
    xf = x_ref[...].astype(jnp.float32)                                # (N, C, HW)
    s = jnp.sum(jnp.sum(xf, axis=0), axis=-1, keepdims=True)          # (C, 1)
    ss = jnp.sum(jnp.sum(xf * xf, axis=0), axis=-1, keepdims=True)    # (C, 1)
    mean = s * inv_count
    var = ss * inv_count - mean * mean                                 # E[x^2]-m^2
    mean_ref[...] = mean
    var_ref[...] = var
    scale = lax.rsqrt(var + eps)[None, :, :] * gain_ref[...]           # (N, C, 1)
    shift = bias_ref[...] - mean[None, :, :] * scale                   # (N, C, 1)
    out_ref[...] = (x_ref[...].astype(jnp.float32) * scale + shift).astype(out_ref.dtype)


# ---------------------------------------------------------------------------
# Pass 1: per-(batch-tile) per-channel sum / sum-of-squares partials.
# Output blocks are indexed only by the batch-tile axis (parallel); the HW axis
# accumulates sequentially ("arbitrary"). Ragged last HW tile is lane-masked.
# ---------------------------------------------------------------------------
def _stats_kernel(x_ref, s_ref, ss_ref, *, hw, thw):
    # x_ref: (tn, C, thw); s_ref/ss_ref: (1, C, 1) f32 partials for this batch tile.
    @pl.when(pl.program_id(1) == 0)
    def _init():
        s_ref[...] = jnp.zeros_like(s_ref)
        ss_ref[...] = jnp.zeros_like(ss_ref)

    x = x_ref[...].astype(jnp.float32)                                 # (tn, C, thw)
    if hw % thw != 0:
        # Ragged last tile: out-of-bounds lanes hold garbage -> zero them.
        lane = lax.broadcasted_iota(jnp.int32, x.shape, 2)
        valid = (pl.program_id(1) * thw + lane) < hw
        x = jnp.where(valid, x, 0.0)

    xs = jnp.sum(x, axis=0)                                            # (C, thw)
    xss = jnp.sum(x * x, axis=0)                                       # (C, thw)
    s_ref[...] += jnp.sum(xs, axis=1, keepdims=True)[None]             # (1, C, 1)
    ss_ref[...] += jnp.sum(xss, axis=1, keepdims=True)[None]


# ---------------------------------------------------------------------------
# Pass 2: apply precomputed per-(n,c) scale/shift (hoisted to JAX between calls).
# ---------------------------------------------------------------------------
def _apply_kernel(x_ref, scale_ref, shift_ref, out_ref):
    x = x_ref[...].astype(jnp.float32)                                 # (tn, C, thw)
    out_ref[...] = (x * scale_ref[...] + shift_ref[...]).astype(out_ref.dtype)


# ---------------------------------------------------------------------------
# Tile heuristic: lane-dense HW tile (multiple of 128, divisor of HW when a
# reasonably large one exists, otherwise ragged + masked), block ~target_bytes.
# ---------------------------------------------------------------------------
def _pick_tiles(N, C, HW, itemsize, target_bytes):
    row_bytes = max(1, C * itemsize)
    max_thw = max(128, ((target_bytes // row_bytes) // 128) * 128)
    hw_padded = -(-HW // 128) * 128
    thw = min(max_thw, hw_padded)
    if HW % thw != 0:
        # Prefer a nearby exact multiple-of-128 divisor (no masking) if it is not
        # too much smaller; otherwise keep the big ragged tile.
        best = 0
        d = 128
        while d <= thw:
            if HW % d == 0:
                best = d
            d += 128
        if best >= thw // 2:
            thw = best
    cap_n = max(1, target_bytes // max(1, C * thw * itemsize))
    tn = 1
    for d in range(1, N + 1):
        if N % d == 0 and d <= cap_n:
            tn = d
    return tn, thw


# ---------------------------------------------------------------------------
# Wrapper
# ---------------------------------------------------------------------------
def mybn_forward(x, gain, bias, eps=EPS, tile_n=None, tile_hw=None,
                 force_tiled=False, return_mean_var=False):
    """x: (N,C,H,W); gain/bias broadcastable to (N,C,1,1). Returns (N,C,H,W)."""
    N, C, H, W = x.shape
    HW = H * W
    x3 = x.reshape(N, C, HW)

    gain3 = jnp.broadcast_to(jnp.reshape(gain, (-1, C)), (N, C)) \
               .reshape(N, C, 1).astype(jnp.float32)
    bias3 = jnp.broadcast_to(jnp.reshape(bias, (-1, C)), (N, C)) \
               .reshape(N, C, 1).astype(jnp.float32)

    itemsize = jnp.dtype(x.dtype).itemsize
    vmem_limit = _vmem_budget()
    inv_count = 1.0 / float(N * HW)

    # ---- fused fast path: everything resident in VMEM (1 HBM read + 1 write) ----
    x_bytes = N * C * HW * itemsize
    f32_bytes = N * C * HW * 4
    fused_need = 2 * x_bytes + 3 * f32_bytes  # x + out + conservative f32 temps
    if not force_tiled and fused_need <= (vmem_limit * 4) // 5:
        out3, mean, var = pl.pallas_call(
            partial(_fused_kernel, inv_count=inv_count, eps=eps),
            out_shape=(jax.ShapeDtypeStruct((N, C, HW), x.dtype),
                       jax.ShapeDtypeStruct((C, 1), jnp.float32),
                       jax.ShapeDtypeStruct((C, 1), jnp.float32)),
            compiler_params=pltpu.CompilerParams(vmem_limit_bytes=vmem_limit),
        )(x3, gain3, bias3)
        out = out3.reshape(N, C, H, W)
        if return_mean_var:
            return out, mean.reshape(C), var.reshape(C)
        return out

    # ---- tiled two-pass path ----
    target_bytes = min(4 << 20, max(1 << 20, vmem_limit // 10))
    auto_tn, auto_thw = _pick_tiles(N, C, HW, itemsize, target_bytes)
    tn = tile_n if tile_n is not None else auto_tn
    thw = tile_hw if tile_hw is not None else auto_thw
    assert N % tn == 0, (tn, N)
    n_n = N // tn
    n_hw = pl.cdiv(HW, thw)

    # pass 1: partial per-channel sums, batch-tile axis megacore-parallel.
    s_part, ss_part = pl.pallas_call(
        partial(_stats_kernel, hw=HW, thw=thw),
        out_shape=(jax.ShapeDtypeStruct((n_n, C, 1), jnp.float32),
                   jax.ShapeDtypeStruct((n_n, C, 1), jnp.float32)),
        grid=(n_n, n_hw),
        in_specs=[pl.BlockSpec((tn, C, thw), lambda i, j: (i, 0, j))],
        out_specs=(pl.BlockSpec((1, C, 1), lambda i, j: (i, 0, 0)),
                   pl.BlockSpec((1, C, 1), lambda i, j: (i, 0, 0))),
        compiler_params=pltpu.CompilerParams(
            dimension_semantics=("parallel", "arbitrary"),
            vmem_limit_bytes=vmem_limit),
    )(x3)

    # Tiny host-side finish: reduce partials, fold BN + gain/bias into scale/shift.
    mean = jnp.sum(s_part, axis=0) * inv_count                    # (C, 1)
    var = jnp.sum(ss_part, axis=0) * inv_count - mean * mean      # (C, 1)
    inv_std = lax.rsqrt(var + eps)
    scale = inv_std[None, :, :] * gain3                           # (N, C, 1) f32
    shift = bias3 - mean[None, :, :] * scale                      # (N, C, 1) f32

    # pass 2: pure streaming apply, fully parallel tiles.
    out3 = pl.pallas_call(
        _apply_kernel,
        out_shape=jax.ShapeDtypeStruct((N, C, HW), x.dtype),
        grid=(n_n, n_hw),
        in_specs=[
            pl.BlockSpec((tn, C, thw), lambda i, j: (i, 0, j)),
            pl.BlockSpec((tn, C, 1), lambda i, j: (i, 0, 0)),
            pl.BlockSpec((tn, C, 1), lambda i, j: (i, 0, 0)),
        ],
        out_specs=pl.BlockSpec((tn, C, thw), lambda i, j: (i, 0, j)),
        compiler_params=pltpu.CompilerParams(
            dimension_semantics=("parallel", "parallel"),
            vmem_limit_bytes=vmem_limit),
    )(x3, scale, shift)

    out = out3.reshape(N, C, H, W)
    if return_mean_var:
        return out, mean.reshape(C), var.reshape(C)
    return out


# ---------------------------------------------------------------------------
# Pure-JAX reference mirroring manual_bn + fused_bn (training mode)
# ---------------------------------------------------------------------------
def mybn_ref(x, gain, bias, eps=EPS):
    xf = x.astype(jnp.float32)
    m = jnp.mean(xf, axis=(0, 2, 3), keepdims=True)
    m2 = jnp.mean(xf * xf, axis=(0, 2, 3), keepdims=True)
    var = m2 - m * m
    scale = lax.rsqrt(var + eps) * gain
    shift = m * scale - bias
    return (xf * scale - shift).astype(x.dtype)


if __name__ == "__main__":
    # Small shapes: x (N,C,H,W); gain/bias (N,C,1,1) as myBN is called from ccbn.
    N, C, H, W = 2, 4, 16, 16

    key = jax.random.PRNGKey(0)
    kx, kg, kb = jax.random.split(key, 3)
    x = jax.random.normal(kx, (N, C, H, W), dtype=jnp.float32)
    gain = 1.0 + 0.1 * jax.random.normal(kg, (N, C, 1, 1), dtype=jnp.float32)
    bias = 0.1 * jax.random.normal(kb, (N, C, 1, 1), dtype=jnp.float32)

    ref = mybn_ref(x, gain, bias)

    # 1) Fused resident-in-VMEM fast path (default at this size).
    out_fused = jax.block_until_ready(mybn_forward(x, gain, bias))
    assert out_fused.shape == (N, C, H, W)
    assert jnp.allclose(out_fused, ref, atol=1e-4, rtol=1e-4), \
        float(jnp.max(jnp.abs(out_fused - ref)))

    # 2) Tiled two-pass path (forced small tiles -> multi-tile accumulation).
    out_tiled = jax.block_until_ready(
        mybn_forward(x, gain, bias, force_tiled=True, tile_n=1, tile_hw=128))
    assert jnp.allclose(out_tiled, ref, atol=1e-4, rtol=1e-4), \
        float(jnp.max(jnp.abs(out_tiled - ref)))

    # 3) Ragged-HW path (HW = 225, not a multiple of 128) through the masked stats tile.
    H2 = W2 = 15
    x2 = jax.random.normal(kx, (N, C, H2, W2), dtype=jnp.float32)
    ref2 = mybn_ref(x2, gain, bias)
    out_ragged = jax.block_until_ready(
        mybn_forward(x2, gain, bias, force_tiled=True, tile_n=1, tile_hw=128))
    assert jnp.allclose(out_ragged, ref2, atol=1e-4, rtol=1e-4), \
        float(jnp.max(jnp.abs(out_ragged - ref2)))

    print("KERNEL_OK")
</pallas_src>

<mosaic_0001>
module attributes {stable_mosaic.version = 11 : i64} {
  func.func @_fused_kernel(%arg0: memref<2x4x256xf32, #tpu.memory_space<vmem>>, %arg1: memref<2x4x1xf32, #tpu.memory_space<vmem>>, %arg2: memref<2x4x1xf32, #tpu.memory_space<vmem>>, %arg3: memref<2x4x256xf32, #tpu.memory_space<vmem>>, %arg4: memref<4x1xf32, #tpu.memory_space<vmem>>, %arg5: memref<4x1xf32, #tpu.memory_space<vmem>>) attributes {dimension_semantics = [], scalar_prefetch = 0 : i64, scratch_operands = 0 : i64, tpu.core_type = #tpu.core_type<tc>} {
    %c0 = arith.constant 0 : index
    %c0_0 = arith.constant 0 : index
    %c0_1 = arith.constant 0 : index
    %0 = vector.load %arg0[%c0, %c0_0, %c0_1] : memref<2x4x256xf32, #tpu.memory_space<vmem>>, vector<2x4x256xf32>
    %cst = arith.constant dense<0.000000e+00> : vector<4x256xf32>
    %1 = vector.multi_reduction <add>, %0, %cst [0] : vector<2x4x256xf32> to vector<4x256xf32>
    %cst_2 = arith.constant dense<0.000000e+00> : vector<4xf32>
    %2 = vector.multi_reduction <add>, %1, %cst_2 [1] : vector<4x256xf32> to vector<4xf32>
    %3 = vector.shape_cast %2 : vector<4xf32> to vector<4x1xf32>
    %4 = arith.mulf %0, %0 : vector<2x4x256xf32>
    %cst_3 = arith.constant dense<0.000000e+00> : vector<4x256xf32>
    %5 = vector.multi_reduction <add>, %4, %cst_3 [0] : vector<2x4x256xf32> to vector<4x256xf32>
    %cst_4 = arith.constant dense<0.000000e+00> : vector<4xf32>
    %6 = vector.multi_reduction <add>, %5, %cst_4 [1] : vector<4x256xf32> to vector<4xf32>
    %7 = vector.shape_cast %6 : vector<4xf32> to vector<4x1xf32>
    %cst_5 = arith.constant 0.001953125 : f32
    %8 = vector.broadcast %cst_5 : f32 to vector<4x1xf32>
    %9 = arith.mulf %3, %8 : vector<4x1xf32>
    %cst_6 = arith.constant 0.001953125 : f32
    %10 = vector.broadcast %cst_6 : f32 to vector<4x1xf32>
    %11 = arith.mulf %7, %10 : vector<4x1xf32>
    %12 = arith.mulf %9, %9 : vector<4x1xf32>
    %13 = arith.subf %11, %12 : vector<4x1xf32>
    %c0_7 = arith.constant 0 : index
    %c0_8 = arith.constant 0 : index
    %14 = vector.load %arg4[%c0_7, %c0_8] : memref<4x1xf32, #tpu.memory_space<vmem>>, vector<4x1xf32>
    tpu.vector_store %arg4[%c0_7, %c0_8], %9 {strides = array<i32>} : memref<4x1xf32, #tpu.memory_space<vmem>>, vector<4x1xf32>,
    %c0_9 = arith.constant 0 : index
    %c0_10 = arith.constant 0 : index
    %15 = vector.load %arg5[%c0_9, %c0_10] : memref<4x1xf32, #tpu.memory_space<vmem>>, vector<4x1xf32>
    tpu.vector_store %arg5[%c0_9, %c0_10], %13 {strides = array<i32>} : memref<4x1xf32, #tpu.memory_space<vmem>>, vector<4x1xf32>,
    %cst_11 = arith.constant 9.99999974E-6 : f32
    %16 = vector.broadcast %cst_11 : f32 to vector<4x1xf32>
    %17 = arith.addf %13, %16 : vector<4x1xf32>
    %18 = math.rsqrt %17 : vector<4x1xf32>
    %19 = vector.shape_cast %18 : vector<4x1xf32> to vector<1x4x1xf32>
    %c0_12 = arith.constant 0 : index
    %c0_13 = arith.constant 0 : index
    %c0_14 = arith.constant 0 : index
    %20 = vector.load %arg1[%c0_12, %c0_13, %c0_14] : memref<2x4x1xf32, #tpu.memory_space<vmem>>, vector<2x4x1xf32>
    %21 = vector.broadcast %19 : vector<1x4x1xf32> to vector<2x4x1xf32>
    %22 = arith.mulf %21, %20 : vector<2x4x1xf32>
    %c0_15 = arith.constant 0 : index
    %c0_16 = arith.constant 0 : index
    %c0_17 = arith.constant 0 : index
    %23 = vector.load %arg2[%c0_15, %c0_16, %c0_17] : memref<2x4x1xf32, #tpu.memory_space<vmem>>, vector<2x4x1xf32>
    %24 = vector.shape_cast %9 : vector<4x1xf32> to vector<1x4x1xf32>
    %25 = vector.broadcast %24 : vector<1x4x1xf32> to vector<2x4x1xf32>
    %26 = arith.mulf %25, %22 : vector<2x4x1xf32>
    %27 = arith.subf %23, %26 : vector<2x4x1xf32>
    %c0_18 = arith.constant 0 : index
    %c0_19 = arith.constant 0 : index
    %c0_20 = arith.constant 0 : index
    %28 = vector.load %arg0[%c0_18, %c0_19, %c0_20] : memref<2x4x256xf32, #tpu.memory_space<vmem>>, vector<2x4x256xf32>
    %29 = vector.broadcast %22 : vector<2x4x1xf32> to vector<2x4x256xf32>
    %30 = arith.mulf %28, %29 : vector<2x4x256xf32>
    %31 = vector.broadcast %27 : vector<2x4x1xf32> to vector<2x4x256xf32>
    %32 = arith.addf %30, %31 : vector<2x4x256xf32>
    %c0_21 = arith.constant 0 : index
    %c0_22 = arith.constant 0 : index
    %c0_23 = arith.constant 0 : index
    %33 = vector.load %arg3[%c0_21, %c0_22, %c0_23] : memref<2x4x256xf32, #tpu.memory_space<vmem>>, vector<2x4x256xf32>
    tpu.vector_store %arg3[%c0_21, %c0_22, %c0_23], %32 {strides = array<i32>} : memref<2x4x256xf32, #tpu.memory_space<vmem>>, vector<2x4x256xf32>,
    return
  }
}

</mosaic_0001>

<llo_original>
// kernel: tpu_custom_call.1
$region0: #{tpu_custom_call.1}
  #allocation0 [shape = 'u32[]', space=smem, size = 0x4, offset = 0x4, fixed_abs, tag = 'smem constant byte address 0x4 - core index']
  #allocation1 [shape = 'u32[144,128]{1,0:T(1,128)}', space=vmem, size = 0x12000, scoped, tag = 'internal scratch']
  %s0 = inlined_call_operand.vmem [shape: f32[2,4,256], index: 0, kind: input, shape index: {}]
  %s1 = inlined_call_operand.vmem [shape: f32[2,4,1], index: 1, kind: input, shape index: {}]
  %s2 = inlined_call_operand.vmem [shape: f32[2,4,1], index: 2, kind: input, shape index: {}]
  %s3 = inlined_call_operand.hbm [shape: f32[2,4,256], index: 3, kind: output, shape index: {0}]
  %s4 = inlined_call_operand.vmem [shape: f32[4,1], index: 4, kind: output, shape index: {1}]
  %s5 = inlined_call_operand.vmem [shape: f32[4,1], index: 5, kind: output, shape index: {2}]
  %6 = xla_tuple %s3, %s4, %s5
  %s7 = sld [smem:[#allocation0]]
  $region38: #{tpu_custom_call.1} parent=0
    _
  %s9 = ssub.s32 1, %s7
  %s10 = scalar_select 0, %s9, %s7
  $region1: #{tpu_custom_call.1} parent=0
    #allocation2 [shape = 'u8[8192]{0}', space=vmem, size = 0x2000, scoped, tag = 'output window, operand 0, single buffered']
    #allocation3 [shape = 's32[1]{0}', space=sflag, size = 0x4, scoped, tag = 'scoped memory for tpu_custom_call.1']
    %11 = vsyncpa [#allocation3], 0
    // Predicated region
    $region2: #{tpu_custom_call.1} parent=1 // pred_check
      _
    $region3: #{tpu_custom_call.1} parent=1 // pred_check_branch
      %13 = sbr.rel (0) target = $region5
    $region4: #{tpu_custom_call.1} parent=1 // pred_region
      _
    $region5: #{tpu_custom_call.1} parent=1 // pred_fallthru
      _
    // Predicated region
    $region6: #{tpu_custom_call.1} parent=1 // pred_check
      _
    $region7: #{tpu_custom_call.1} parent=1 // pred_check_branch
      %15 = sbr.rel (0) target = $region9
    $region8: #{tpu_custom_call.1} parent=1 // pred_region
      _
    $region9: #{tpu_custom_call.1} parent=1 // pred_fallthru
      _
    // Predicated region
    $region10: #{tpu_custom_call.1} parent=1 // pred_check
      _
    $region11: #{tpu_custom_call.1} parent=1 // pred_check_branch
      %17 = sbr.rel (0) target = $region13
    $region12: #{tpu_custom_call.1} parent=1 // pred_region
      _
    $region13: #{tpu_custom_call.1} parent=1 // pred_fallthru
      _
    %v18 = vld [vmem:[%s0] sm:$0xff]
    %v19 = vld [vmem:[%s0 + $0x8] sm:$0xff]
    %v22 = vcombine.high %v18, %v18
    %v23 = vcombine.high %v19, %v19
    %vm26 = vcmask 1043456
    %v27 = vsel %vm26, %v18, 0.0
    %v28 = vsel %vm26, %v19, 0.0
    %v29 = vadd.f32 %v27, %v28
    %v30 = vsel %vm26, %v22, 0.0
    %v31 = vsel %vm26, %v23, 0.0
    %v32 = vadd.f32 %v30, %v31
    %v33 = vsel %vm26, %v29, 0.0
    %v34 = vsel %vm26, %v32, 0.0
    %v35 = vadd.f32 %v33, %v34
    %36 = vadd.xlane.f32.xlu0 %v35
    %v37 = vpop.xlane.xlu0 %36
    %v38 = vmul.f32 %v18, %v18
    %v39 = vmul.f32 %v19, %v19
    %v42 = vcombine.high %v38, %v38
    %v43 = vcombine.high %v39, %v39
    %v46 = vsel %vm26, %v38, 0.0
    %v47 = vsel %vm26, %v39, 0.0
    %v48 = vadd.f32 %v46, %v47
    %v49 = vsel %vm26, %v42, 0.0
    %v50 = vsel %vm26, %v43, 0.0
    %v51 = vadd.f32 %v49, %v50
    %v52 = vsel %vm26, %v48, 0.0
    %v53 = vsel %vm26, %v51, 0.0
    %v54 = vadd.f32 %v52, %v53
    %55 = vadd.xlane.f32.xlu0 %v54
    %v56 = vpop.xlane.xlu0 %55
    %v57 = vmul.f32 %v37, 0.001953125
    %v58 = vmul.f32 %v56, 0.001953125
    %v59 = vmul.f32 %v57, %v57
    %v60 = vsub.f32 %v58, %v59
    %vm61 = vcmask 3072
    %62 = vst.msk [vmem:[%s4] sm:$0xf] %vm61, %v57
    %63 = vst.msk [vmem:[%s5] sm:$0xf] %vm61, %v60
    %v64 = vadd.f32 %v60, 1e-05
    %v65 = vrsqrt.pop %v64
    %v66 = vld [vmem:[%s1] sm:$0xf]
    %v67 = vld [vmem:[%s1 + $0x4] sm:$0xf]
    %v68 = vmul.f32 %v65, %v66
    %v69 = vmul.f32 %v65, %v67
    %v70 = vld [vmem:[%s2] sm:$0xf]
    %v71 = vld [vmem:[%s2 + $0x4] sm:$0xf]
    %v72 = vmul.f32 %v57, %v68
    %v73 = vmul.f32 %v57, %v69
    %v74 = vsub.f32 %v70, %v72
    %v75 = vsub.f32 %v71, %v73
    %v76 = vld [vmem:[%s0] sm:$0xff]
    %v77 = vld [vmem:[%s0 + $0x8] sm:$0xff]
    %79 = vset.pattern.permute.xlu0 0
    %80 = vperm.xlu0 %79, %v68
    %v81 = vpop.permute.xlu0 %80
    %83 = vset.pattern.permute.xlu0 0
    %84 = vperm.xlu0 %83, %v69
    %v85 = vpop.permute.xlu0 %84
    %v87 = vunpack.c.l.s4 839922192
    %v88 = vunpack.c.0.s8 %v87
    %v89 = vlaneseq
    %v90 = vshrl.u32 %v89, 7
    %v91 = vsub.s32 %v88, %v90
    %v92 = vrot.slane %v81, %v91
    %v94 = vunpack.c.l.s4 839922192
    %v95 = vunpack.c.0.s8 %v94
    %v96 = vlaneseq
    %v97 = vshrl.u32 %v96, 7
    %v98 = vsub.s32 %v95, %v97
    %v99 = vrot.slane %v85, %v98
    %v102 = vmul.f32 %v76, %v92
    %v103 = vmul.f32 %v77, %v99
    %105 = vset.pattern.permute.xlu0 0
    %106 = vperm.xlu0 %105, %v74
    %v107 = vpop.permute.xlu0 %106
    %109 = vset.pattern.permute.xlu0 0
    %110 = vperm.xlu0 %109, %v75
    %v111 = vpop.permute.xlu0 %110
    %v113 = vunpack.c.l.s4 839922192
    %v114 = vunpack.c.0.s8 %v113
    %v115 = vlaneseq
    %v116 = vshrl.u32 %v115, 7
    %v117 = vsub.s32 %v114, %v116
    %v118 = vrot.slane %v107, %v117
    %v120 = vunpack.c.l.s4 839922192
    %v121 = vunpack.c.0.s8 %v120
    %v122 = vlaneseq
    %v123 = vshrl.u32 %v122, 7
    %v124 = vsub.s32 %v121, %v123
    %v125 = vrot.slane %v111, %v124
    %v128 = vadd.f32 %v102, %v118
    %v129 = vadd.f32 %v103, %v125
    %130 = vst [vmem:[#allocation2] sm:$0xff] %v128
    %131 = vst [vmem:[#allocation2 + $0x8] sm:$0xff] %v129
    // Predicated region
    $region14: #{tpu_custom_call.1} parent=1 // pred_check
      _
    $region15: #{tpu_custom_call.1} parent=1 // pred_check_branch
      %133 = sbr.rel (0) target = $region17
    $region16: #{tpu_custom_call.1} parent=1 // pred_region
      %s135 = ssub.s32 256, 256
      %136 = vsyncadd [#allocation3], %s135
      %s137 = sshll.u32 [#allocation2], 4
      %s138 = int_to_ptr.vmem [resolvable:$true] %s137
      %143 = dma.vmem_to_hbm [thread:$0]  %s138, 256, %s3, [#allocation3], 128, 128, 8
    $region17: #{tpu_custom_call.1} parent=1 // pred_fallthru
      _
    // Predicated region
    $region18: #{tpu_custom_call.1} parent=1 // pred_check
      _
    $region19: #{tpu_custom_call.1} parent=1 // pred_check_branch
      %145 = sbr.rel (0) target = $region21
    $region20: #{tpu_custom_call.1} parent=1 // pred_region
      _
    $region21: #{tpu_custom_call.1} parent=1 // pred_fallthru
      _
    // Predicated region
    $region22: #{tpu_custom_call.1} parent=1 // pred_check
      _
    $region23: #{tpu_custom_call.1} parent=1 // pred_check_branch
      %147 = sbr.rel (0) target = $region25
    $region24: #{tpu_custom_call.1} parent=1 // pred_region
      _
    $region25: #{tpu_custom_call.1} parent=1 // pred_fallthru
      _
    // Predicated region
    $region26: #{tpu_custom_call.1} parent=1 // pred_check
      _
    $region27: #{tpu_custom_call.1} parent=1 // pred_check_branch
      %149 = sbr.rel (0) target = $region29
    $region28: #{tpu_custom_call.1} parent=1 // pred_region
      %150 = dma.done [#allocation3], 256
    $region29: #{tpu_custom_call.1} parent=1 // pred_fallthru
      _
    // Predicated region
    $region30: #{tpu_custom_call.1} parent=1 // pred_check
      _
    $region31: #{tpu_custom_call.1} parent=1 // pred_check_branch
      %152 = sbr.rel (0) target = $region33
    $region32: #{tpu_custom_call.1} parent=1 // pred_region
      _
    $region33: #{tpu_custom_call.1} parent=1 // pred_fallthru
      _
    // Predicated region
    $region34: #{tpu_custom_call.1} parent=1 // pred_check
      _
    $region35: #{tpu_custom_call.1} parent=1 // pred_check_branch
      %154 = sbr.rel (0) target = $region37
    $region36: #{tpu_custom_call.1} parent=1 // pred_region
      _
    $region37: #{tpu_custom_call.1} parent=1 // pred_fallthru
      _
    %155 = vsyncpa [#allocation3], 1

</llo_original>
